<compile_context>
chip_gen: v7x
topology: tpu7x:2x2x1
jax: 0.10.0
libtpu: 0.0.40
codegen_flags: <defaults>
</compile_context>

<pallas_src>
import functools

import jax
import jax.numpy as jnp
from jax.experimental import pallas as pl
from jax.experimental.pallas import tpu as pltpu

# ---------------- small synthetic BERT config ----------------
VOCAB = 100
TYPE_VOCAB = 2
MAX_POS = 16
HIDDEN = 32          # stands in for 768
NUM_HEADS = 2
HEAD_DIM = HIDDEN // NUM_HEADS
INTERMEDIATE = 64
NUM_LAYERS = 2
LN_EPS = 1e-12


# ---------------- in-kernel helpers ----------------
def _ln(x, g, b):
    """LayerNorm over the lane (hidden) dim; x:(M,H), g/b:(1,H)."""
    mu = jnp.mean(x, axis=-1, keepdims=True)
    var = jnp.mean((x - mu) ** 2, axis=-1, keepdims=True)
    return (x - mu) * jax.lax.rsqrt(var + LN_EPS) * g + b


# ---------------- fused encoder-layer kernel ----------------
def _encoder_layer_kernel(x_ref, m_ref,
                          wqkv_ref, bqkv_ref, wo_ref, bo_ref,
                          ln1g_ref, ln1b_ref,
                          w1_ref, b1_ref, w2_ref, b2_ref,
                          ln2g_ref, ln2b_ref,
                          o_ref,
                          ctx_ref):
    # refs: x/o -> (1, S, H); mask -> (1, 1, S); weights full; ctx scratch (S, H)
    x = x_ref[0]                              # (S, H)
    mask = m_ref[0]                           # (1, S)
    bias = (1.0 - mask) * -10000.0            # BERT-style additive key mask

    # ---- fused QKV projection: qkv never leaves VMEM ----
    qkv = jnp.dot(x, wqkv_ref[...], preferred_element_type=jnp.float32) + bqkv_ref[...]

    # ---- multi-head self-attention ----
    # Per-head context is written straight into the VMEM scratch slab (no concat).
    # At real H=768 / 12 heads, replace this static loop with a single batched-head
    # dot_general (heads packed in the lane dim) and flash-style KV tiling for S>=512.
    scale = 1.0 / (HEAD_DIM ** 0.5)
    for h in range(NUM_HEADS):                # static head loop
        lo = h * HEAD_DIM
        qs = qkv[:, lo:lo + HEAD_DIM]
        ks = qkv[:, HIDDEN + lo:HIDDEN + lo + HEAD_DIM]
        vs = qkv[:, 2 * HIDDEN + lo:2 * HIDDEN + lo + HEAD_DIM]
        s = jnp.dot(qs, ks.T, preferred_element_type=jnp.float32) * scale + bias
        s = s - jnp.max(s, axis=-1, keepdims=True)
        p = jnp.exp(s)
        p = p * pl.reciprocal(jnp.sum(p, axis=-1, keepdims=True), approx=False)
        ctx_ref[:, lo:lo + HEAD_DIM] = jnp.dot(p, vs, preferred_element_type=jnp.float32)

    # ---- attention output projection + residual + LN1 (all in VMEM) ----
    attn = jnp.dot(ctx_ref[...], wo_ref[...], preferred_element_type=jnp.float32) + bo_ref[...]
    h1 = _ln(x + attn, ln1g_ref[...], ln1b_ref[...])

    # ---- FFN: w1 + gelu + w2 fused ----
    # TODO(synk): HF/PyTorch BERT uses exact erf GELU; tanh approximation used here.
    f = jnp.dot(h1, w1_ref[...], preferred_element_type=jnp.float32) + b1_ref[...]
    f = jax.nn.gelu(f, approximate=True)
    f = jnp.dot(f, w2_ref[...], preferred_element_type=jnp.float32) + b2_ref[...]

    # ---- residual + LN2 ----
    o_ref[0] = _ln(h1 + f, ln2g_ref[...], ln2b_ref[...])


def encoder_layer(x, mask3, lp):
    """One fused BERT encoder layer. x:(B,S,H) f32, mask3:(B,1,S) f32."""
    B, S, H = x.shape
    spec_act = pl.BlockSpec((1, S, H), lambda b: (b, 0, 0))
    spec_msk = pl.BlockSpec((1, 1, S), lambda b: (b, 0, 0))

    def full_spec(shape):
        rank = len(shape)
        return pl.BlockSpec(shape, lambda b, _r=rank: (0,) * _r)

    weight_args = [
        lp["wqkv"], lp["bqkv"].reshape(1, -1),
        lp["wo"], lp["bo"].reshape(1, -1),
        lp["ln1_g"].reshape(1, -1), lp["ln1_b"].reshape(1, -1),
        lp["w1"], lp["b1"].reshape(1, -1),
        lp["w2"], lp["b2"].reshape(1, -1),
        lp["ln2_g"].reshape(1, -1), lp["ln2_b"].reshape(1, -1),
    ]
    # TODO(synk): at real sizes store encoder weights bf16 in HBM and upcast in-kernel
    # (f32 accumulation), and tile the matmuls (128-aligned on v5e, 256-aligned on
    # v6e/v7x, smaller working set for v7x's 64 MiB VMEM).
    in_specs = [spec_act, spec_msk] + [full_spec(a.shape) for a in weight_args]

    return pl.pallas_call(
        _encoder_layer_kernel,
        out_shape=jax.ShapeDtypeStruct((B, S, H), jnp.float32),
        grid=(B,),
        in_specs=in_specs,
        out_specs=spec_act,
        scratch_shapes=[pltpu.VMEM((S, H), jnp.float32)],
        compiler_params=pltpu.CompilerParams(dimension_semantics=("parallel",)),
    )(x, mask3, *weight_args)


# ---------------- embedding layernorm (row-tiled) ----------------
def _layernorm_kernel(x_ref, g_ref, b_ref, o_ref):
    o_ref[...] = _ln(x_ref[...], g_ref[...], b_ref[...])


def layernorm(x, g, b, row_tile=8):
    M, H = x.shape
    tm = row_tile if (M % row_tile == 0) else M
    return pl.pallas_call(
        _layernorm_kernel,
        out_shape=jax.ShapeDtypeStruct((M, H), jnp.float32),
        grid=(M // tm,),
        in_specs=[pl.BlockSpec((tm, H), lambda i: (i, 0)),
                  pl.BlockSpec((1, H), lambda i: (0, 0)),
                  pl.BlockSpec((1, H), lambda i: (0, 0))],
        out_specs=pl.BlockSpec((tm, H), lambda i: (i, 0)),
        compiler_params=pltpu.CompilerParams(dimension_semantics=("parallel",)),
    )(x, g.reshape(1, H), b.reshape(1, H))


# ---------------- fused pooling + classification head ----------------
def _pool_head_kernel(x_ref, w_ref, b_ref, o_ref):
    x = x_ref[...]                                   # (B, S, H)
    apool = jnp.mean(x, axis=1)                      # torch.mean(o1, 1)
    mpool = jnp.max(x, axis=1)                       # torch.max(o1, 1).values
    # bert_drop (p=0.3) is identity at inference.
    # TODO(synk): training-mode dropout (pltpu.prng_seed/prng_random_bits mask) not implemented.
    w = w_ref[...]                                   # (1, 2H) lane-dense weight row
    # N=1 Linear done as VPU lane reductions (no MXU matmul with 1-lane output,
    # no (B,2H) concat materialized).
    logits = (jnp.sum(apool * w[:, :HIDDEN], axis=-1, keepdims=True)
              + jnp.sum(mpool * w[:, HIDDEN:], axis=-1, keepdims=True)
              + b_ref[...])
    o_ref[...] = logits


def pool_head(x, w, b):
    B, S, H = x.shape
    # TODO(synk): at real sizes fuse pooling+head into the last encoder-layer kernel
    # to avoid one extra HBM pass over o1.
    return pl.pallas_call(
        _pool_head_kernel,
        out_shape=jax.ShapeDtypeStruct((B, 1), jnp.float32),
        grid=(1,),
        in_specs=[pl.BlockSpec((B, S, H), lambda i: (0, 0, 0)),
                  pl.BlockSpec((1, 2 * H), lambda i: (0, 0)),
                  pl.BlockSpec((1, 1), lambda i: (0, 0))],
        out_specs=pl.BlockSpec((B, 1), lambda i: (0, 0)),
    )(x, w.reshape(1, 2 * H), b.reshape(1, 1))


# ---------------- parameters (deterministic init) ----------------
def init_params(key):
    ks = jax.random.split(key, 4 + NUM_LAYERS)

    def normal(k, shape, std=0.02):
        return (std * jax.random.normal(k, shape)).astype(jnp.float32)

    params = {
        "word_emb": normal(ks[0], (VOCAB, HIDDEN)),
        "pos_emb": normal(ks[1], (MAX_POS, HIDDEN)),
        "type_emb": normal(ks[2], (TYPE_VOCAB, HIDDEN)),
        "emb_ln_g": jnp.ones((HIDDEN,), jnp.float32),
        "emb_ln_b": jnp.zeros((HIDDEN,), jnp.float32),
        "out_w": normal(ks[3], (2 * HIDDEN, 1)),      # nn.Linear(768*2, 1)
        "out_b": jnp.zeros((1,), jnp.float32),
        "layers": [],
    }
    for l in range(NUM_LAYERS):
        kk = jax.random.split(ks[4 + l], 4)
        params["layers"].append({
            "wqkv": normal(kk[0], (HIDDEN, 3 * HIDDEN)),
            "bqkv": jnp.zeros((3 * HIDDEN,), jnp.float32),
            "wo": normal(kk[1], (HIDDEN, HIDDEN)),
            "bo": jnp.zeros((HIDDEN,), jnp.float32),
            "ln1_g": jnp.ones((HIDDEN,), jnp.float32),
            "ln1_b": jnp.zeros((HIDDEN,), jnp.float32),
            "w1": normal(kk[2], (HIDDEN, INTERMEDIATE)),
            "b1": jnp.zeros((INTERMEDIATE,), jnp.float32),
            "w2": normal(kk[3], (INTERMEDIATE, HIDDEN)),
            "b2": jnp.zeros((HIDDEN,), jnp.float32),
            "ln2_g": jnp.ones((HIDDEN,), jnp.float32),
            "ln2_b": jnp.zeros((HIDDEN,), jnp.float32),
        })
    return params


# ---------------- forward (JigsawModel.forward) ----------------
def jigsaw_forward(params, ids, mask, token_type_ids):
    B, S = ids.shape
    H = HIDDEN
    # BERT embeddings: word + position + token_type, then LayerNorm.
    # (embedding-table gathers are plain-JAX glue; LN is a Pallas kernel)
    emb = (params["word_emb"][ids]
           + params["pos_emb"][jnp.arange(S)][None, :, :]
           + params["type_emb"][token_type_ids])
    h = layernorm(emb.reshape(B * S, H), params["emb_ln_g"], params["emb_ln_b"])
    h = h.reshape(B, S, H)
    mask3 = mask.astype(jnp.float32).reshape(B, 1, S)

    for lp in params["layers"]:
        h = encoder_layer(h, mask3, lp)   # one fused Pallas kernel per layer

    # o1 == h (BERT sequence output).
    # TODO(synk): BERT pooler output (o2) is unused by JigsawModel.forward; not computed.
    # apool = mean(o1,1); mpool = max(o1,1); dropout(eval); Linear(2H,1) — fused kernel:
    return pool_head(h, params["out_w"], params["out_b"])


if __name__ == "__main__":
    key = jax.random.PRNGKey(0)
    pkey, ikey = jax.random.split(key)
    params = init_params(pkey)

    B, S = 2, 8
    ids = jax.random.randint(ikey, (B, S), 0, VOCAB, dtype=jnp.int32)
    mask = jnp.ones((B, S), jnp.int32).at[:, 6:].set(0)      # last 2 tokens padded
    token_type_ids = jnp.zeros((B, S), jnp.int32)

    out = jigsaw_forward(params, ids, mask, token_type_ids)
    jax.block_until_ready(out)
    assert out.shape == (B, 1) and out.dtype == jnp.float32
    print("KERNEL_OK")
</pallas_src>

<mosaic_0001>
module attributes {stable_mosaic.version = 11 : i64} {
  func.func @_layernorm_kernel(%arg0: i32, %arg1: memref<8x32xf32, #tpu.memory_space<vmem>>, %arg2: memref<1x32xf32, #tpu.memory_space<vmem>>, %arg3: memref<1x32xf32, #tpu.memory_space<vmem>>, %arg4: memref<8x32xf32, #tpu.memory_space<vmem>>) attributes {dimension_semantics = [#tpu.dimension_semantics<parallel>], iteration_bounds = array<i64: 2>, scalar_prefetch = 0 : i64, scratch_operands = 0 : i64, tpu.core_type = #tpu.core_type<tc>, window_params = [{transform_indices = @transform_0, window_bounds = array<i64: 8, 32>}, {pipeline_mode = #tpu.pipeline_mode<synchronous>, transform_indices = @transform_1, window_bounds = array<i64: 1, 32>}, {pipeline_mode = #tpu.pipeline_mode<synchronous>, transform_indices = @transform_2, window_bounds = array<i64: 1, 32>}, {transform_indices = @transform_3, window_bounds = array<i64: 8, 32>}]} {
    %c0 = arith.constant 0 : index
    %c0_0 = arith.constant 0 : index
    %0 = vector.load %arg1[%c0, %c0_0] : memref<8x32xf32, #tpu.memory_space<vmem>>, vector<8x32xf32>
    %c0_1 = arith.constant 0 : index
    %c0_2 = arith.constant 0 : index
    %1 = vector.load %arg2[%c0_1, %c0_2] : memref<1x32xf32, #tpu.memory_space<vmem>>, vector<1x32xf32>
    %c0_3 = arith.constant 0 : index
    %c0_4 = arith.constant 0 : index
    %2 = vector.load %arg3[%c0_3, %c0_4] : memref<1x32xf32, #tpu.memory_space<vmem>>, vector<1x32xf32>
    %cst = arith.constant dense<0.000000e+00> : vector<8xf32>
    %3 = vector.multi_reduction <add>, %0, %cst [1] : vector<8x32xf32> to vector<8xf32>
    %4 = vector.shape_cast %3 : vector<8xf32> to vector<8x1xf32>
    %cst_5 = arith.constant 3.200000e+01 : f32
    %5 = vector.broadcast %cst_5 : f32 to vector<8x1xf32>
    %6 = arith.divf %4, %5 : vector<8x1xf32>
    %7 = vector.broadcast %6 : vector<8x1xf32> to vector<8x32xf32>
    %8 = arith.subf %0, %7 : vector<8x32xf32>
    %9 = arith.mulf %8, %8 : vector<8x32xf32>
    %cst_6 = arith.constant dense<0.000000e+00> : vector<8xf32>
    %10 = vector.multi_reduction <add>, %9, %cst_6 [1] : vector<8x32xf32> to vector<8xf32>
    %11 = vector.shape_cast %10 : vector<8xf32> to vector<8x1xf32>
    %cst_7 = arith.constant 3.200000e+01 : f32
    %12 = vector.broadcast %cst_7 : f32 to vector<8x1xf32>
    %13 = arith.divf %11, %12 : vector<8x1xf32>
    %14 = vector.broadcast %6 : vector<8x1xf32> to vector<8x32xf32>
    %15 = arith.subf %0, %14 : vector<8x32xf32>
    %cst_8 = arith.constant 9.99999996E-13 : f32
    %16 = vector.broadcast %cst_8 : f32 to vector<8x1xf32>
    %17 = arith.addf %13, %16 : vector<8x1xf32>
    %18 = math.rsqrt %17 : vector<8x1xf32>
    %19 = vector.broadcast %18 : vector<8x1xf32> to vector<8x32xf32>
    %20 = arith.mulf %15, %19 : vector<8x32xf32>
    %21 = vector.broadcast %1 : vector<1x32xf32> to vector<8x32xf32>
    %22 = arith.mulf %20, %21 : vector<8x32xf32>
    %23 = vector.broadcast %2 : vector<1x32xf32> to vector<8x32xf32>
    %24 = arith.addf %22, %23 : vector<8x32xf32>
    %c0_9 = arith.constant 0 : index
    %c0_10 = arith.constant 0 : index
    %25 = vector.load %arg4[%c0_9, %c0_10] : memref<8x32xf32, #tpu.memory_space<vmem>>, vector<8x32xf32>
    tpu.vector_store %arg4[%c0_9, %c0_10], %24 {strides = array<i32>} : memref<8x32xf32, #tpu.memory_space<vmem>>, vector<8x32xf32>,
    return
  }
  func.func @transform_0(%arg0: i32) -> (i32, i32) {
    %c0_i32 = arith.constant 0 : i32
    %c0_i32_0 = arith.constant 0 : i32
    return %arg0, %c0_i32 : i32, i32
  }
  func.func @transform_1(%arg0: i32) -> (i32, i32) {
    %c0_i32 = arith.constant 0 : i32
    %c0_i32_0 = arith.constant 0 : i32
    %c0_i32_1 = arith.constant 0 : i32
    return %c0_i32, %c0_i32_0 : i32, i32
  }
  func.func @transform_2(%arg0: i32) -> (i32, i32) {
    %c0_i32 = arith.constant 0 : i32
    %c0_i32_0 = arith.constant 0 : i32
    %c0_i32_1 = arith.constant 0 : i32
    return %c0_i32, %c0_i32_0 : i32, i32
  }
  func.func @transform_3(%arg0: i32) -> (i32, i32) {
    %c0_i32 = arith.constant 0 : i32
    %c0_i32_0 = arith.constant 0 : i32
    return %arg0, %c0_i32 : i32, i32
  }
}

</mosaic_0001>

<llo_original>
// kernel: tpu_custom_call.1
$region0: #{tpu_custom_call.1}
  #allocation0 [shape = 'u32[]', space=smem, size = 0x4, offset = 0x4, fixed_abs, tag = 'smem constant byte address 0x4 - core index']
  #allocation1 [shape = 'u32[144,128]{1,0:T(1,128)}', space=vmem, size = 0x12000, scoped, tag = 'internal scratch']
  %s0 = inlined_call_operand.hbm [shape: f32[16,32], index: 0, kind: input, shape index: {}]
  %s1 = inlined_call_operand.vmem [shape: f32[1,32], index: 1, kind: input, shape index: {}]
  %s2 = inlined_call_operand.vmem [shape: f32[1,32], index: 2, kind: input, shape index: {}]
  %s3 = inlined_call_operand.hbm [shape: f32[16,32], index: 3, kind: output, shape index: {}]
  %s4 = sld [smem:[#allocation0]]
  $region49: #{tpu_custom_call.1} parent=0
    _
  %s6 = ssub.s32 1, %s4
  %s7 = scalar_select 0, %s6, %s4
  $region1: #{tpu_custom_call.1} parent=0
    #allocation2 [shape = 'u8[8192]{0}', space=vmem, size = 0x2000, scoped, tag = 'input window, operand 0']
    #allocation3 [shape = 's32[2]{0}', space=sflag, size = 0x8, scoped, tag = 'scoped memory for tpu_custom_call.1']
    #allocation4 [shape = 's32[2]{0}', space=sflag, size = 0x8, scoped, tag = 'scoped memory for tpu_custom_call.1']
    #allocation5 [shape = 'u8[8192]{0}', space=vmem, size = 0x2000, scoped, tag = 'output window, operand 0']
    %8 = vsyncpa [#allocation3], 0
    %s9 = scalar_lea.sflag [#allocation3], 1
    %10 = vsyncpa %s9, 0
    %11 = vsyncpa [#allocation4], 0
    %s12 = scalar_lea.sflag [#allocation4], 1
    %13 = vsyncpa %s12, 0
    loop: start=0, step=1, limit=4
    $region2: #{tpu_custom_call.1} parent=1 // loop_pre_header
      _
    $region3: #{tpu_custom_call.1} parent=1 // loop_header
      %s15 = sphi 0, %s19
      %p16 = scmp.ge.s32.totalorder %s15, 4
      %s25 = sphi 0, %s27
      %s28 = sphi 0, %s25
      %s29 = sphi 0, %s28
      %s45 = sphi 0, %s29
      %s49 = sphi 0, %s49
      %s51 = sphi 0, %s49
      %s52 = sphi 0, %s51
      %s66 = sphi 0, %s52
      %s70 = sphi 0, %s70
      %s72 = sphi 0, %s70
      %s73 = sphi 0, %s72
      %s87 = sphi 0, %s73
      %s93 = sphi 0, %s95
      %s96 = sphi 0, %s93
      %s97 = sphi 0, %s96
      %s113 = sphi 0, %s97
    $region4: #{tpu_custom_call.1} parent=1 // loop_header_branch
      %18 = sbr.rel (%p16) target = $region8
    $region5: #{tpu_custom_call.1} parent=1 // loop_body
      %s20 = ssub.s32 %s15, 1
      %s21 = ssub.s32 %s15, 2
      %s22 = sadd.s32 %s15, 1
      %s23 = ssub.s32 %s15, %s22
      %p24 = scmp.eq.s32.totalorder %s23, 0
      %s26 = sadd.s32 %s25, 1
      %s27 = scalar_select %p24, %s25, %s26
      %p30 = pneg %p24
      %p31 = scmp.eq.s32.totalorder %s15, 1
      %p32 = por %p30, %p31
      %p33 = scmp.ne.s32.totalorder %s25, %s28
      %p34 = scmp.eq.s32.totalorder %s15, 0
      %p35 = por %p33, %p34
      %p36 = scmp.ne.s32.totalorder %s25, %s28
      %p37 = scmp.eq.s32.totalorder %s20, 1
      %p38 = por %p36, %p37
      %p39 = scmp.ne.s32.totalorder %s28, %s29
      %p40 = scmp.eq.s32.totalorder %s20, 0
      %p41 = por %p39, %p40
      %p42 = scmp.ne.s32.totalorder %s28, %s29
      %p43 = scmp.eq.s32.totalorder %s21, 1
      %p44 = por %p42, %p43
      %p46 = scmp.ne.s32.totalorder %s29, %s45
      %p47 = scmp.eq.s32.totalorder %s21, 0
      %p48 = por %p46, %p47
      %s50 = sadd.s32 %s49, 1
      %p53 = scmp.eq.s32.totalorder %s15, 1
      %p54 = scmp.ne.s32.totalorder %s49, %s51
      %p55 = scmp.eq.s32.totalorder %s15, 0
      %p56 = por %p54, %p55
      %p57 = scmp.ne.s32.totalorder %s49, %s51
      %p58 = scmp.eq.s32.totalorder %s20, 1
      %p59 = por %p57, %p58
      %p60 = scmp.ne.s32.totalorder %s51, %s52
      %p61 = scmp.eq.s32.totalorder %s20, 0
      %p62 = por %p60, %p61
      %p63 = scmp.ne.s32.totalorder %s51, %s52
      %p64 = scmp.eq.s32.totalorder %s21, 1
      %p65 = por %p63, %p64
      %p67 = scmp.ne.s32.totalorder %s52, %s66
      %p68 = scmp.eq.s32.totalorder %s21, 0
      %p69 = por %p67, %p68
      %s71 = sadd.s32 %s70, 1
      %p74 = scmp.eq.s32.totalorder %s15, 1
      %p75 = scmp.ne.s32.totalorder %s70, %s72
      %p76 = scmp.eq.s32.totalorder %s15, 0
      %p77 = por %p75, %p76
      %p78 = scmp.ne.s32.totalorder %s70, %s72
      %p79 = scmp.eq.s32.totalorder %s20, 1
      %p80 = por %p78, %p79
      %p81 = scmp.ne.s32.totalorder %s72, %s73
      %p82 = scmp.eq.s32.totalorder %s20, 0
      %p83 = por %p81, %p82
      %p84 = scmp.ne.s32.totalorder %s72, %s73
      %p85 = scmp.eq.s32.totalorder %s21, 1
      %p86 = por %p84, %p85
      %p88 = scmp.ne.s32.totalorder %s73, %s87
      %p89 = scmp.eq.s32.totalorder %s21, 0
      %p90 = por %p88, %p89
      %s91 = ssub.s32 %s15, %s22
      %p92 = scmp.eq.s32.totalorder %s91, 0
      %s94 = sadd.s32 %s93, 1
      %s95 = scalar_select %p92, %s93, %s94
      %p98 = pneg %p92
      %p99 = scmp.eq.s32.totalorder %s15, 1
      %p100 = por %p98, %p99
      %p101 = scmp.ne.s32.totalorder %s93, %s96
      %p102 = scmp.eq.s32.totalorder %s15, 0
      %p103 = por %p101, %p102
      %p104 = scmp.ne.s32.totalorder %s93, %s96
      %p105 = scmp.eq.s32.totalorder %s20, 1
      %p106 = por %p104, %p105
      %p107 = scmp.ne.s32.totalorder %s96, %s97
      %p108 = scmp.eq.s32.totalorder %s20, 0
      %p109 = por %p107, %p108
      %p110 = scmp.ne.s32.totalorder %s96, %s97
      %p111 = scmp.eq.s32.totalorder %s21, 1
      %p112 = por %p110, %p111
      %p114 = scmp.ne.s32.totalorder %s97, %s113
      %p115 = scmp.eq.s32.totalorder %s21, 0
      %p116 = por %p114, %p115
      %p117 = scmp.le.s32.totalorder 1, %s15
      %p118 = scmp.lt.s32.totalorder %s15, 3
      %p119 = pnand %p117, %p118
      %p120 = pneg %p119
      // Predicated region
      $region9: #{tpu_custom_call.1} parent=5 // pred_check
        _
      $region10: #{tpu_custom_call.1} parent=5 // pred_check_branch
        %122 = sbr.rel (%p119) target = $region12
      $region11: #{tpu_custom_call.1} parent=5 // pred_region
        %s123 = ssub.s32 %s15, 1
        // Predicated region
        $region13: #{tpu_custom_call.1} parent=11 // pred_check
          %p124 = pneg %p62
        $region14: #{tpu_custom_call.1} parent=11 // pred_check_branch
          %126 = sbr.rel (%p124) target = $region16
        $region15: #{tpu_custom_call.1} parent=11 // pred_region
          _
        $region16: #{tpu_custom_call.1} parent=11 // pred_fallthru
          _
        // Predicated region
        $region17: #{tpu_custom_call.1} parent=11 // pred_check
          %p127 = pneg %p83
        $region18: #{tpu_custom_call.1} parent=11 // pred_check_branch
          %129 = sbr.rel (%p127) target = $region20
        $region19: #{tpu_custom_call.1} parent=11 // pred_region
          _
        $region20: #{tpu_custom_call.1} parent=11 // pred_fallthru
          _
      $region12: #{tpu_custom_call.1} parent=5 // pred_fallthru
        _
      %p130 = scmp.lt.s32.totalorder %s15, 2
      // Predicated region
      $region21: #{tpu_custom_call.1} parent=5 // pred_check
        %p131 = pneg %p130
      $region22: #{tpu_custom_call.1} parent=5 // pred_check_branch
        %133 = sbr.rel (%p131) target = $region24
      $region23: #{tpu_custom_call.1} parent=5 // pred_region
        // Predicated region
        $region25: #{tpu_custom_call.1} parent=23 // pred_check
          %p134 = pneg %p35
        $region26: #{tpu_custom_call.1} parent=23 // pred_check_branch
          %136 = sbr.rel (%p134) target = $region28
        $region27: #{tpu_custom_call.1} parent=23 // pred_region
          %s137 = sand.u32 %s25, 1
          %s138 = scalar_lea.sflag [#allocation3], %s137
          %s139 = sand.u32 %s25, 1
          %s140 = smul.addr %s139, 8
          %s141 = scalar_lea.vmem [#allocation2], %s140
          %s143 = ssub.s32 128, 128
          %144 = vsyncadd %s138, %s143
          %s145 = smul.addr %s15, 128
          %s146 = scalar_lea.hbm %s0, %s145
          %s148 = sshll.u32 %s141, 4
          %s149 = int_to_ptr.vmem [resolvable:$true] %s148
          %151 = dma.hbm_to_vmem [thread:$0]  %s146, 128, %s149, %s138
        $region28: #{tpu_custom_call.1} parent=23 // pred_fallthru
          _
      $region24: #{tpu_custom_call.1} parent=5 // pred_fallthru
        _
      %p152 = scmp.le.s32.totalorder 1, %s15
      %p153 = scmp.lt.s32.totalorder %s15, 3
      %p154 = pnand %p152, %p153
      %p155 = pneg %p154
      // Predicated region
      $region29: #{tpu_custom_call.1} parent=5 // pred_check
        _
      $region30: #{tpu_custom_call.1} parent=5 // pred_check_branch
        %157 = sbr.rel (%p154) target = $region32
      $region31: #{tpu_custom_call.1} parent=5 // pred_region
        %s158 = ssub.s32 %s15, 1
        %s159 = sand.u32 %s28, 1
        %s160 = scalar_lea.sflag [#allocation3], %s159
        %s161 = sand.u32 %s28, 1
        %s162 = smul.addr %s161, 8
        %s163 = scalar_lea.vmem [#allocation2], %s162
        // Predicated region
        $region33: #{tpu_custom_call.1} parent=31 // pred_check
          %p164 = pneg %p41
        $region34: #{tpu_custom_call.1} parent=31 // pred_check_branch
          %166 = sbr.rel (%p164) target = $region36
        $region35: #{tpu_custom_call.1} parent=31 // pred_region
          %167 = dma.done %s160, 128
        $region36: #{tpu_custom_call.1} parent=31 // pred_fallthru
          _
        %s168 = sand.u32 %s28, 1
        %s169 = scalar_lea.sflag [#allocation3], %s168
        %s170 = sand.u32 %s28, 1
        %s171 = smul.addr %s170, 8
        %s172 = scalar_lea.vmem [#allocation2], %s171
        %p173 = pneg %p41
        %p174 = pneg %p38
        %p175 = pneg %p62
        %p176 = pneg %p59
        %p177 = pneg %p83
        %p178 = pneg %p80
        %p179 = pneg %p109
        %p180 = pneg %p106
        %s181 = sand.u32 %s96, 1
        %s182 = scalar_lea.sflag [#allocation4], %s181
        %s183 = sand.u32 %s96, 1
        %s184 = smul.addr %s183, 8
        %s185 = scalar_lea.vmem [#allocation5], %s184
        %v186 = vld [vmem:[%s163] sm:$0xff]
        %v187 = vld [vmem:[%s1] sm:$0x1]
        %v188 = vld [vmem:[%s2] sm:$0x1]
        %vm189 = vcmask 261120
        %v190 = vsel %vm189, %v186, 0.0
        %191 = vadd.xlane.f32.xlu0 %v190
        %v192 = vpop.xlane.xlu0 %191
        %v193 = vrcp.pop 32.0
        %v194 = vmul.f32 %v192, %v193
        %v195 = vsub.f32 %v186, %v194
        %v196 = vmul.f32 %v195, %v195
        %v197 = vsel %vm189, %v196, 0.0
        %198 = vadd.xlane.f32.xlu0 %v197
        %v199 = vpop.xlane.xlu0 %198
        %v200 = vmul.f32 %v199, %v193
        %v201 = vadd.f32 %v200, 1e-12
        %v202 = vrsqrt.pop %v201
        %v203 = vmul.f32 %v195, %v202
        %v205 = vlaneseq
        %v206 = vshrl.u32 %v205, 7
        %v207 = vsub.s32 0, %v206
        %v208 = vrot.slane %v187, %v207
        %v210 = vmul.f32 %v203, %v208
        %v212 = vlaneseq
        %v213 = vshrl.u32 %v212, 7
        %v214 = vsub.s32 0, %v213
        %v215 = vrot.slane %v188, %v214
        %v217 = vadd.f32 %v210, %v215
        %218 = vst.msk [vmem:[%s185] sm:$0xff] %vm189, %v217
        %s219 = sand.u32 %s96, 1
        %s220 = scalar_lea.sflag [#allocation4], %s219
        %s221 = sand.u32 %s96, 1
        %s222 = smul.addr %s221, 8
        %s223 = scalar_lea.vmem [#allocation5], %s222
        // Predicated region
        $region37: #{tpu_custom_call.1} parent=31 // pred_check
          %p224 = pneg %p106
        $region38: #{tpu_custom_call.1} parent=31 // pred_check_branch
          %226 = sbr.rel (%p224) target = $region40
        $region39: #{tpu_custom_call.1} parent=31 // pred_region
          %s228 = ssub.s32 128, 128
          %229 = vsyncadd %s220, %s228
          %s230 = smul.addr %s20, 128
          %s231 = scalar_lea.hbm %s3, %s230
          %s233 = sshll.u32 %s223, 4
          %s234 = int_to_ptr.vmem [resolvable:$true] %s233
          %236 = dma.vmem_to_hbm [thread:$0]  %s234, 128, %s231, %s220
        $region40: #{tpu_custom_call.1} parent=31 // pred_fallthru
          _
      $region32: #{tpu_custom_call.1} parent=5 // pred_fallthru
        _
      %p237 = scmp.le.s32.totalorder 2, %s15
      // Predicated region
      $region41: #{tpu_custom_call.1} parent=5 // pred_check
        %p238 = pneg %p237
      $region42: #{tpu_custom_call.1} parent=5 // pred_check_branch
        %240 = sbr.rel (%p238) target = $region44
      $region43: #{tpu_custom_call.1} parent=5 // pred_region
        %s241 = ssub.s32 %s15, 2
        // Predicated region
        $region45: #{tpu_custom_call.1} parent=43 // pred_check
          %p242 = pneg %p112
        $region46: #{tpu_custom_call.1} parent=43 // pred_check_branch
          %244 = sbr.rel (%p242) target = $region48
        $region47: #{tpu_custom_call.1} parent=43 // pred_region
          %s245 = sand.u32 %s97, 1
          %s246 = scalar_lea.sflag [#allocation4], %s245
          %s247 = sand.u32 %s97, 1
          %s248 = smul.addr %s247, 8
          %s249 = scalar_lea.vmem [#allocation5], %s248
          %250 = dma.done %s246, 128
        $region48: #{tpu_custom_call.1} parent=43 // pred_fallthru
          _
      $region44: #{tpu_custom_call.1} parent=5 // pred_fallthru
        _
    $region6: #{tpu_custom_call.1} parent=1 // loop_footer
      %s19 = sadd.s32 1, %s15
    $region7: #{tpu_custom_call.1} parent=1 // loop_footer_branch
      %14 = sbr.rel target = $region3
    $region8: #{tpu_custom_call.1} parent=1 // loop_exit
      _
    %251 = vsyncpa [#allocation3], 1
    %s252 = scalar_lea.sflag [#allocation3], 1
    %253 = vsyncpa %s252, 1
    %254 = vsyncpa [#allocation4], 1
    %s255 = scalar_lea.sflag [#allocation4], 1
    %256 = vsyncpa %s255, 1

</llo_original>
